<compile_context>
chip_gen: v6e
topology: v6e:2x2x1
jax: 0.10.0
libtpu: 0.0.40
codegen_flags: <defaults>
</compile_context>

<pallas_src>
import jax
import jax.numpy as jnp
from jax import lax
from jax.experimental import pallas as pl
from jax.experimental.pallas import tpu as pltpu

LN_EPS = 1e-5  # PyTorch nn.LayerNorm default


def _layernorm(x, g, b):
    # PyTorch LayerNorm: biased variance over last dim (reference only).
    mu = jnp.mean(x, axis=-1, keepdims=True)
    var = jnp.mean((x - mu) ** 2, axis=-1, keepdims=True)
    return (x - mu) * lax.rsqrt(var + LN_EPS) * g + b


def _ln_noaffine(x):
    # Affine-free LayerNorm (affine folded into the following Linear).
    mu = jnp.mean(x, axis=-1, keepdims=True)
    var = jnp.mean((x - mu) ** 2, axis=-1, keepdims=True)
    return (x - mu) * lax.rsqrt(var + LN_EPS)


def critic_kernel(
    state_ref, action_ref,
    w1s_ref, w1a_ref, c1_ref,        # layer-1, both branches lane-stacked (out = 512)
    w2a_ref, c2a_ref,                # branch-1 layer-2 (LN affine pre-folded)
    w2b_ref, c2b_ref,                # branch-2 layer-2 (LN affine pre-folded)
    wha_ref, whb_ref, ch_ref,        # heads, zero-padded to (256, 2); bias (1, 2)
    q_ref,                           # (B, 2) output: lane 0 = q1, lane 1 = q2
):
    s = state_ref[...].astype(jnp.float32)
    a = action_ref[...].astype(jnp.float32)
    d = s.shape[-1] + a.shape[-1]
    inv_d = jnp.float32(1.0 / d)

    # ---- shared input LayerNorm (stats from the two parts; no concat needed).
    mu = (jnp.sum(s, axis=-1, keepdims=True)
          + jnp.sum(a, axis=-1, keepdims=True)) * inv_d
    var = (jnp.sum((s - mu) ** 2, axis=-1, keepdims=True)
           + jnp.sum((a - mu) ** 2, axis=-1, keepdims=True)) * inv_d
    rstd = lax.rsqrt(var + LN_EPS)
    s_n = ((s - mu) * rstd).astype(jnp.bfloat16)
    a_n = ((a - mu) * rstd).astype(jnp.bfloat16)

    # ---- layer 1: both branches in ONE lane-stacked matmul -> (B, 512).
    h = (jnp.dot(s_n, w1s_ref[...], preferred_element_type=jnp.float32)
         + jnp.dot(a_n, w1a_ref[...], preferred_element_type=jnp.float32)
         + c1_ref[...])
    h = jnp.maximum(h, 0.0)

    h1 = h[:, :256]   # branch 1
    h2 = h[:, 256:]   # branch 2

    # ---- layer 2 (LN affine folded; LN math in f32, dot operands bf16).
    def layer2(x, w_ref, c_ref):
        xn = _ln_noaffine(x).astype(jnp.bfloat16)
        y = jnp.dot(xn, w_ref[...], preferred_element_type=jnp.float32) + c_ref[...]
        return jnp.maximum(y, 0.0)

    a1 = layer2(h1, w2a_ref, c2a_ref)
    a2 = layer2(h2, w2b_ref, c2b_ref)

    # ---- head: two partial dots into one lane-dense (B, 2) result.
    n1 = _ln_noaffine(a1).astype(jnp.bfloat16)
    n2 = _ln_noaffine(a2).astype(jnp.bfloat16)
    q = (jnp.dot(n1, wha_ref[...], preferred_element_type=jnp.float32)
         + jnp.dot(n2, whb_ref[...], preferred_element_type=jnp.float32)
         + ch_ref[...])
    q_ref[...] = q.astype(q_ref.dtype)


def _fold(g, b, w, c):
    """Fold a LayerNorm affine into the following Linear.

    y = (x_n * g + b) @ W + c  ==  x_n @ (g^T * W) + (b @ W + c)
    """
    w_f = g.reshape(-1, 1) * w
    c_f = b @ w + c
    return w_f, c_f


@jax.jit
def critic_forward(state, action, params):
    (g1, b1, w1, c1, g2, b2, w2, c2, g3, b3, w3, c3,
     g4, b4, w4, c4, g5, b5, w5, c5, g6, b6, w6, c6) = params

    B, s_dim = state.shape

    # --- trace-time folding / packing (a handful of tiny XLA ops).
    w1f, c1f = _fold(g1, b1, w1, c1)
    w4f, c4f = _fold(g4, b4, w4, c4)
    w1_full = jnp.concatenate([w1f, w4f], axis=1)             # (d, 512)
    c1_full = jnp.concatenate([c1f, c4f], axis=1)             # (1, 512)
    w1s = w1_full[:s_dim].astype(jnp.bfloat16)                # (s_dim, 512)
    w1a = w1_full[s_dim:].astype(jnp.bfloat16)                # (a_dim, 512)

    w2a, c2a = _fold(g2, b2, w2, c2)
    w2b, c2b = _fold(g5, b5, w5, c5)
    w2a = w2a.astype(jnp.bfloat16)
    w2b = w2b.astype(jnp.bfloat16)

    w3f, c3f = _fold(g3, b3, w3, c3)                          # (256, 1), (1, 1)
    w6f, c6f = _fold(g6, b6, w6, c6)
    zeros = jnp.zeros_like(w3f)
    wha = jnp.concatenate([w3f, zeros], axis=1).astype(jnp.bfloat16)  # (256, 2)
    whb = jnp.concatenate([zeros, w6f], axis=1).astype(jnp.bfloat16)  # (256, 2)
    ch = jnp.concatenate([c3f, c6f], axis=1)                  # (1, 2)

    vmem = pl.BlockSpec(memory_space=pltpu.MemorySpace.VMEM)
    inputs = (state, action, w1s, w1a, c1_full,
              w2a, c2a, w2b, c2b, wha, whb, ch)
    q = pl.pallas_call(
        critic_kernel,
        out_shape=jax.ShapeDtypeStruct((B, 2), jnp.float32),
        in_specs=[vmem] * len(inputs),
        out_specs=vmem,
    )(*inputs)
    return q[:, 0:1], q[:, 1:2]


def init_params(key, state_dim, action_dim):
    """Deterministic synthetic init matching the PyTorch module's shapes.

    Linear weights are pre-transposed to (in, out); biases / LN params are
    (1, N). LN params are randomized (not the PyTorch 1/0 default) so the
    affine-folding path is actually exercised by the test.
    """
    d = state_dim + action_dim
    dims = [(d, 256), (256, 256), (256, 1)] * 2  # ln1..ln3, ln4..ln6
    ln_dims = [d, 256, 256] * 2                  # norm1..norm3, norm4..norm6

    keys = jax.random.split(key, 4 * len(dims))
    params = []
    for i, ((fan_in, fan_out), ln_d) in enumerate(zip(dims, ln_dims)):
        g = 1.0 + 0.1 * jax.random.normal(keys[4 * i + 0], (1, ln_d), jnp.float32)
        b = 0.1 * jax.random.normal(keys[4 * i + 1], (1, ln_d), jnp.float32)
        bound = 1.0 / jnp.sqrt(jnp.float32(fan_in))
        w = jax.random.uniform(keys[4 * i + 2], (fan_in, fan_out), jnp.float32,
                               -bound, bound)
        c = jax.random.uniform(keys[4 * i + 3], (1, fan_out), jnp.float32,
                               -bound, bound)
        params.extend([g, b, w, c])
    return tuple(params)


def _reference(state, action, params):
    """Pure-JAX f32 reference matching the PyTorch forward exactly."""
    sa = jnp.concatenate([state, action], axis=1)

    def branch(p):
        (g1, b1, w1, c1, g2, b2, w2, c2, g3, b3, w3, c3) = p
        h = _layernorm(sa, g1, b1)
        h = jnp.maximum(h @ w1 + c1, 0.0)
        h = _layernorm(h, g2, b2)
        h = jnp.maximum(h @ w2 + c2, 0.0)
        h = _layernorm(h, g3, b3)
        return h @ w3 + c3

    return branch(params[:12]), branch(params[12:])


if __name__ == "__main__":
    state_dim, action_dim, batch = 16, 8, 8

    key = jax.random.PRNGKey(0)
    k_state, k_action, k_params = jax.random.split(key, 3)
    state = jax.random.normal(k_state, (batch, state_dim), jnp.float32)
    action = jax.random.normal(k_action, (batch, action_dim), jnp.float32)
    params = init_params(k_params, state_dim, action_dim)

    q1, q2 = critic_forward(state, action, params)
    jax.block_until_ready((q1, q2))

    r1, r2 = _reference(state, action, params)
    assert q1.shape == (batch, 1) and q2.shape == (batch, 1)
    # Tolerance reflects bf16 matmul operands (f32 accumulation + f32 LN math).
    assert jnp.allclose(q1, r1, atol=3e-2, rtol=3e-2)
    assert jnp.allclose(q2, r2, atol=3e-2, rtol=3e-2)

    print("KERNEL_OK")
</pallas_src>

<mosaic_0001>
module attributes {stable_mosaic.version = 11 : i64} {
  func.func @critic_kernel(%arg0: memref<8x16xf32, #tpu.memory_space<vmem>>, %arg1: memref<8x8xf32, #tpu.memory_space<vmem>>, %arg2: memref<16x512xbf16, #tpu.memory_space<vmem>>, %arg3: memref<8x512xbf16, #tpu.memory_space<vmem>>, %arg4: memref<1x512xf32, #tpu.memory_space<vmem>>, %arg5: memref<256x256xbf16, #tpu.memory_space<vmem>>, %arg6: memref<1x256xf32, #tpu.memory_space<vmem>>, %arg7: memref<256x256xbf16, #tpu.memory_space<vmem>>, %arg8: memref<1x256xf32, #tpu.memory_space<vmem>>, %arg9: memref<256x2xbf16, #tpu.memory_space<vmem>>, %arg10: memref<256x2xbf16, #tpu.memory_space<vmem>>, %arg11: memref<1x2xf32, #tpu.memory_space<vmem>>, %arg12: memref<8x2xf32, #tpu.memory_space<vmem>>) attributes {dimension_semantics = [], scalar_prefetch = 0 : i64, scratch_operands = 0 : i64, tpu.core_type = #tpu.core_type<tc>} {
    %c0 = arith.constant 0 : index
    %c0_0 = arith.constant 0 : index
    %0 = vector.load %arg0[%c0, %c0_0] : memref<8x16xf32, #tpu.memory_space<vmem>>, vector<8x16xf32>
    %c0_1 = arith.constant 0 : index
    %c0_2 = arith.constant 0 : index
    %1 = vector.load %arg1[%c0_1, %c0_2] : memref<8x8xf32, #tpu.memory_space<vmem>>, vector<8x8xf32>
    %cst = arith.constant dense<0.000000e+00> : vector<8xf32>
    %2 = vector.multi_reduction <add>, %0, %cst [1] : vector<8x16xf32> to vector<8xf32>
    %3 = vector.shape_cast %2 : vector<8xf32> to vector<8x1xf32>
    %cst_3 = arith.constant dense<0.000000e+00> : vector<8xf32>
    %4 = vector.multi_reduction <add>, %1, %cst_3 [1] : vector<8x8xf32> to vector<8xf32>
    %5 = vector.shape_cast %4 : vector<8xf32> to vector<8x1xf32>
    %6 = arith.addf %3, %5 : vector<8x1xf32>
    %cst_4 = arith.constant 0.0416666679 : f32
    %7 = vector.broadcast %cst_4 : f32 to vector<8x1xf32>
    %8 = arith.mulf %6, %7 : vector<8x1xf32>
    %9 = vector.broadcast %8 : vector<8x1xf32> to vector<8x16xf32>
    %10 = arith.subf %0, %9 : vector<8x16xf32>
    %11 = arith.mulf %10, %10 : vector<8x16xf32>
    %cst_5 = arith.constant dense<0.000000e+00> : vector<8xf32>
    %12 = vector.multi_reduction <add>, %11, %cst_5 [1] : vector<8x16xf32> to vector<8xf32>
    %13 = vector.shape_cast %12 : vector<8xf32> to vector<8x1xf32>
    %14 = vector.broadcast %8 : vector<8x1xf32> to vector<8x8xf32>
    %15 = arith.subf %1, %14 : vector<8x8xf32>
    %16 = arith.mulf %15, %15 : vector<8x8xf32>
    %cst_6 = arith.constant dense<0.000000e+00> : vector<8xf32>
    %17 = vector.multi_reduction <add>, %16, %cst_6 [1] : vector<8x8xf32> to vector<8xf32>
    %18 = vector.shape_cast %17 : vector<8xf32> to vector<8x1xf32>
    %19 = arith.addf %13, %18 : vector<8x1xf32>
    %cst_7 = arith.constant 0.0416666679 : f32
    %20 = vector.broadcast %cst_7 : f32 to vector<8x1xf32>
    %21 = arith.mulf %19, %20 : vector<8x1xf32>
    %cst_8 = arith.constant 9.99999974E-6 : f32
    %22 = vector.broadcast %cst_8 : f32 to vector<8x1xf32>
    %23 = arith.addf %21, %22 : vector<8x1xf32>
    %24 = math.rsqrt %23 : vector<8x1xf32>
    %25 = vector.broadcast %8 : vector<8x1xf32> to vector<8x16xf32>
    %26 = arith.subf %0, %25 : vector<8x16xf32>
    %27 = vector.broadcast %24 : vector<8x1xf32> to vector<8x16xf32>
    %28 = arith.mulf %26, %27 : vector<8x16xf32>
    %29 = arith.truncf %28 : vector<8x16xf32> to vector<8x16xbf16>
    %30 = vector.broadcast %8 : vector<8x1xf32> to vector<8x8xf32>
    %31 = arith.subf %1, %30 : vector<8x8xf32>
    %32 = vector.broadcast %24 : vector<8x1xf32> to vector<8x8xf32>
    %33 = arith.mulf %31, %32 : vector<8x8xf32>
    %34 = arith.truncf %33 : vector<8x8xf32> to vector<8x8xbf16>
    %c0_9 = arith.constant 0 : index
    %c0_10 = arith.constant 0 : index
    %35 = vector.load %arg2[%c0_9, %c0_10] : memref<16x512xbf16, #tpu.memory_space<vmem>>, vector<16x512xbf16>
    %cst_11 = arith.constant dense<0.000000e+00> : vector<8x512xf32>
    %36 = tpu.matmul %29, %35, %cst_11 {dimension_numbers = #tpu.dot_dimension_numbers<[1], [0], [0], [1], [0, 0, 1, 1], [], []>} : vector<8x16xbf16>, vector<16x512xbf16>, vector<8x512xf32> -> vector<8x512xf32>
    %c0_12 = arith.constant 0 : index
    %c0_13 = arith.constant 0 : index
    %37 = vector.load %arg3[%c0_12, %c0_13] : memref<8x512xbf16, #tpu.memory_space<vmem>>, vector<8x512xbf16>
    %cst_14 = arith.constant dense<0.000000e+00> : vector<8x512xf32>
    %38 = tpu.matmul %34, %37, %cst_14 {dimension_numbers = #tpu.dot_dimension_numbers<[1], [0], [0], [1], [0, 0, 1, 1], [], []>} : vector<8x8xbf16>, vector<8x512xbf16>, vector<8x512xf32> -> vector<8x512xf32>
    %39 = arith.addf %36, %38 : vector<8x512xf32>
    %c0_15 = arith.constant 0 : index
    %c0_16 = arith.constant 0 : index
    %40 = vector.load %arg4[%c0_15, %c0_16] : memref<1x512xf32, #tpu.memory_space<vmem>>, vector<1x512xf32>
    %41 = vector.broadcast %40 : vector<1x512xf32> to vector<8x512xf32>
    %42 = arith.addf %39, %41 : vector<8x512xf32>
    %cst_17 = arith.constant 0.000000e+00 : f32
    %43 = vector.broadcast %cst_17 : f32 to vector<8x512xf32>
    %44 = arith.maximumf %42, %43 : vector<8x512xf32>
    %45 = vector.extract_strided_slice %44 {offsets = [0, 0], sizes = [8, 256], strides = [1, 1]} : vector<8x512xf32> to vector<8x256xf32>
    %46 = vector.extract_strided_slice %44 {offsets = [0, 256], sizes = [8, 256], strides = [1, 1]} : vector<8x512xf32> to vector<8x256xf32>
    %cst_18 = arith.constant dense<0.000000e+00> : vector<8xf32>
    %47 = vector.multi_reduction <add>, %45, %cst_18 [1] : vector<8x256xf32> to vector<8xf32>
    %48 = vector.shape_cast %47 : vector<8xf32> to vector<8x1xf32>
    %cst_19 = arith.constant 2.560000e+02 : f32
    %49 = vector.broadcast %cst_19 : f32 to vector<8x1xf32>
    %50 = arith.divf %48, %49 : vector<8x1xf32>
    %51 = vector.broadcast %50 : vector<8x1xf32> to vector<8x256xf32>
    %52 = arith.subf %45, %51 : vector<8x256xf32>
    %53 = arith.mulf %52, %52 : vector<8x256xf32>
    %cst_20 = arith.constant dense<0.000000e+00> : vector<8xf32>
    %54 = vector.multi_reduction <add>, %53, %cst_20 [1] : vector<8x256xf32> to vector<8xf32>
    %55 = vector.shape_cast %54 : vector<8xf32> to vector<8x1xf32>
    %cst_21 = arith.constant 2.560000e+02 : f32
    %56 = vector.broadcast %cst_21 : f32 to vector<8x1xf32>
    %57 = arith.divf %55, %56 : vector<8x1xf32>
    %58 = vector.broadcast %50 : vector<8x1xf32> to vector<8x256xf32>
    %59 = arith.subf %45, %58 : vector<8x256xf32>
    %cst_22 = arith.constant 9.99999974E-6 : f32
    %60 = vector.broadcast %cst_22 : f32 to vector<8x1xf32>
    %61 = arith.addf %57, %60 : vector<8x1xf32>
    %62 = math.rsqrt %61 : vector<8x1xf32>
    %63 = vector.broadcast %62 : vector<8x1xf32> to vector<8x256xf32>
    %64 = arith.mulf %59, %63 : vector<8x256xf32>
    %65 = arith.truncf %64 : vector<8x256xf32> to vector<8x256xbf16>
    %c0_23 = arith.constant 0 : index
    %c0_24 = arith.constant 0 : index
    %66 = vector.load %arg5[%c0_23, %c0_24] : memref<256x256xbf16, #tpu.memory_space<vmem>>, vector<256x256xbf16>
    %cst_25 = arith.constant dense<0.000000e+00> : vector<8x256xf32>
    %67 = tpu.matmul %65, %66, %cst_25 {dimension_numbers = #tpu.dot_dimension_numbers<[1], [0], [0], [1], [0, 0, 1, 1], [], []>} : vector<8x256xbf16>, vector<256x256xbf16>, vector<8x256xf32> -> vector<8x256xf32>
    %c0_26 = arith.constant 0 : index
    %c0_27 = arith.constant 0 : index
    %68 = vector.load %arg6[%c0_26, %c0_27] : memref<1x256xf32, #tpu.memory_space<vmem>>, vector<1x256xf32>
    %69 = vector.broadcast %68 : vector<1x256xf32> to vector<8x256xf32>
    %70 = arith.addf %67, %69 : vector<8x256xf32>
    %cst_28 = arith.constant 0.000000e+00 : f32
    %71 = vector.broadcast %cst_28 : f32 to vector<8x256xf32>
    %72 = arith.maximumf %70, %71 : vector<8x256xf32>
    %cst_29 = arith.constant dense<0.000000e+00> : vector<8xf32>
    %73 = vector.multi_reduction <add>, %46, %cst_29 [1] : vector<8x256xf32> to vector<8xf32>
    %74 = vector.shape_cast %73 : vector<8xf32> to vector<8x1xf32>
    %cst_30 = arith.constant 2.560000e+02 : f32
    %75 = vector.broadcast %cst_30 : f32 to vector<8x1xf32>
    %76 = arith.divf %74, %75 : vector<8x1xf32>
    %77 = vector.broadcast %76 : vector<8x1xf32> to vector<8x256xf32>
    %78 = arith.subf %46, %77 : vector<8x256xf32>
    %79 = arith.mulf %78, %78 : vector<8x256xf32>
    %cst_31 = arith.constant dense<0.000000e+00> : vector<8xf32>
    %80 = vector.multi_reduction <add>, %79, %cst_31 [1] : vector<8x256xf32> to vector<8xf32>
    %81 = vector.shape_cast %80 : vector<8xf32> to vector<8x1xf32>
    %cst_32 = arith.constant 2.560000e+02 : f32
    %82 = vector.broadcast %cst_32 : f32 to vector<8x1xf32>
    %83 = arith.divf %81, %82 : vector<8x1xf32>
    %84 = vector.broadcast %76 : vector<8x1xf32> to vector<8x256xf32>
    %85 = arith.subf %46, %84 : vector<8x256xf32>
    %cst_33 = arith.constant 9.99999974E-6 : f32
    %86 = vector.broadcast %cst_33 : f32 to vector<8x1xf32>
    %87 = arith.addf %83, %86 : vector<8x1xf32>
    %88 = math.rsqrt %87 : vector<8x1xf32>
    %89 = vector.broadcast %88 : vector<8x1xf32> to vector<8x256xf32>
    %90 = arith.mulf %85, %89 : vector<8x256xf32>
    %91 = arith.truncf %90 : vector<8x256xf32> to vector<8x256xbf16>
    %c0_34 = arith.constant 0 : index
    %c0_35 = arith.constant 0 : index
    %92 = vector.load %arg7[%c0_34, %c0_35] : memref<256x256xbf16, #tpu.memory_space<vmem>>, vector<256x256xbf16>
    %cst_36 = arith.constant dense<0.000000e+00> : vector<8x256xf32>
    %93 = tpu.matmul %91, %92, %cst_36 {dimension_numbers = #tpu.dot_dimension_numbers<[1], [0], [0], [1], [0, 0, 1, 1], [], []>} : vector<8x256xbf16>, vector<256x256xbf16>, vector<8x256xf32> -> vector<8x256xf32>
    %c0_37 = arith.constant 0 : index
    %c0_38 = arith.constant 0 : index
    %94 = vector.load %arg8[%c0_37, %c0_38] : memref<1x256xf32, #tpu.memory_space<vmem>>, vector<1x256xf32>
    %95 = vector.broadcast %94 : vector<1x256xf32> to vector<8x256xf32>
    %96 = arith.addf %93, %95 : vector<8x256xf32>
    %cst_39 = arith.constant 0.000000e+00 : f32
    %97 = vector.broadcast %cst_39 : f32 to vector<8x256xf32>
    %98 = arith.maximumf %96, %97 : vector<8x256xf32>
    %cst_40 = arith.constant dense<0.000000e+00> : vector<8xf32>
    %99 = vector.multi_reduction <add>, %72, %cst_40 [1] : vector<8x256xf32> to vector<8xf32>
    %100 = vector.shape_cast %99 : vector<8xf32> to vector<8x1xf32>
    %cst_41 = arith.constant 2.560000e+02 : f32
    %101 = vector.broadcast %cst_41 : f32 to vector<8x1xf32>
    %102 = arith.divf %100, %101 : vector<8x1xf32>
    %103 = vector.broadcast %102 : vector<8x1xf32> to vector<8x256xf32>
    %104 = arith.subf %72, %103 : vector<8x256xf32>
    %105 = arith.mulf %104, %104 : vector<8x256xf32>
    %cst_42 = arith.constant dense<0.000000e+00> : vector<8xf32>
    %106 = vector.multi_reduction <add>, %105, %cst_42 [1] : vector<8x256xf32> to vector<8xf32>
    %107 = vector.shape_cast %106 : vector<8xf32> to vector<8x1xf32>
    %cst_43 = arith.constant 2.560000e+02 : f32
    %108 = vector.broadcast %cst_43 : f32 to vector<8x1xf32>
    %109 = arith.divf %107, %108 : vector<8x1xf32>
    %110 = vector.broadcast %102 : vector<8x1xf32> to vector<8x256xf32>
    %111 = arith.subf %72, %110 : vector<8x256xf32>
    %cst_44 = arith.constant 9.99999974E-6 : f32
    %112 = vector.broadcast %cst_44 : f32 to vector<8x1xf32>
    %113 = arith.addf %109, %112 : vector<8x1xf32>
    %114 = math.rsqrt %113 : vector<8x1xf32>
    %115 = vector.broadcast %114 : vector<8x1xf32> to vector<8x256xf32>
    %116 = arith.mulf %111, %115 : vector<8x256xf32>
    %117 = arith.truncf %116 : vector<8x256xf32> to vector<8x256xbf16>
    %cst_45 = arith.constant dense<0.000000e+00> : vector<8xf32>
    %118 = vector.multi_reduction <add>, %98, %cst_45 [1] : vector<8x256xf32> to vector<8xf32>
    %119 = vector.shape_cast %118 : vector<8xf32> to vector<8x1xf32>
    %cst_46 = arith.constant 2.560000e+02 : f32
    %120 = vector.broadcast %cst_46 : f32 to vector<8x1xf32>
    %121 = arith.divf %119, %120 : vector<8x1xf32>
    %122 = vector.broadcast %121 : vector<8x1xf32> to vector<8x256xf32>
    %123 = arith.subf %98, %122 : vector<8x256xf32>
    %124 = arith.mulf %123, %123 : vector<8x256xf32>
    %cst_47 = arith.constant dense<0.000000e+00> : vector<8xf32>
    %125 = vector.multi_reduction <add>, %124, %cst_47 [1] : vector<8x256xf32> to vector<8xf32>
    %126 = vector.shape_cast %125 : vector<8xf32> to vector<8x1xf32>
    %cst_48 = arith.constant 2.560000e+02 : f32
    %127 = vector.broadcast %cst_48 : f32 to vector<8x1xf32>
    %128 = arith.divf %126, %127 : vector<8x1xf32>
    %129 = vector.broadcast %121 : vector<8x1xf32> to vector<8x256xf32>
    %130 = arith.subf %98, %129 : vector<8x256xf32>
    %cst_49 = arith.constant 9.99999974E-6 : f32
    %131 = vector.broadcast %cst_49 : f32 to vector<8x1xf32>
    %132 = arith.addf %128, %131 : vector<8x1xf32>
    %133 = math.rsqrt %132 : vector<8x1xf32>
    %134 = vector.broadcast %133 : vector<8x1xf32> to vector<8x256xf32>
    %135 = arith.mulf %130, %134 : vector<8x256xf32>
    %136 = arith.truncf %135 : vector<8x256xf32> to vector<8x256xbf16>
    %c0_50 = arith.constant 0 : index
    %c0_51 = arith.constant 0 : index
    %137 = vector.load %arg9[%c0_50, %c0_51] : memref<256x2xbf16, #tpu.memory_space<vmem>>, vector<256x2xbf16>
    %cst_52 = arith.constant dense<0.000000e+00> : vector<8x2xf32>
    %138 = tpu.matmul %117, %137, %cst_52 {dimension_numbers = #tpu.dot_dimension_numbers<[1], [0], [0], [1], [0, 0, 1, 1], [], []>} : vector<8x256xbf16>, vector<256x2xbf16>, vector<8x2xf32> -> vector<8x2xf32>
    %c0_53 = arith.constant 0 : index
    %c0_54 = arith.constant 0 : index
    %139 = vector.load %arg10[%c0_53, %c0_54] : memref<256x2xbf16, #tpu.memory_space<vmem>>, vector<256x2xbf16>
    %cst_55 = arith.constant dense<0.000000e+00> : vector<8x2xf32>
    %140 = tpu.matmul %136, %139, %cst_55 {dimension_numbers = #tpu.dot_dimension_numbers<[1], [0], [0], [1], [0, 0, 1, 1], [], []>} : vector<8x256xbf16>, vector<256x2xbf16>, vector<8x2xf32> -> vector<8x2xf32>
    %141 = arith.addf %138, %140 : vector<8x2xf32>
    %c0_56 = arith.constant 0 : index
    %c0_57 = arith.constant 0 : index
    %142 = vector.load %arg11[%c0_56, %c0_57] : memref<1x2xf32, #tpu.memory_space<vmem>>, vector<1x2xf32>
    %143 = vector.broadcast %142 : vector<1x2xf32> to vector<8x2xf32>
    %144 = arith.addf %141, %143 : vector<8x2xf32>
    %c0_58 = arith.constant 0 : index
    %c0_59 = arith.constant 0 : index
    %145 = vector.load %arg12[%c0_58, %c0_59] : memref<8x2xf32, #tpu.memory_space<vmem>>, vector<8x2xf32>
    tpu.vector_store %arg12[%c0_58, %c0_59], %144 {strides = array<i32>} : memref<8x2xf32, #tpu.memory_space<vmem>>, vector<8x2xf32>,
    return
  }
}

</mosaic_0001>

<llo_original>
// kernel: critic_forward.1
$region0: #{critic_forward.1}
  #allocation0 [shape = 'u32[]', space=smem, size = 0x4, offset = 0x4, fixed_abs, tag = 'smem constant byte address 0x4 - core index']
  #allocation1 [shape = 'u32[144,128]{1,0:T(1,128)}', space=vmem, size = 0x12000, scoped, tag = 'internal scratch']
  %s0 = inlined_call_operand.vmem [shape: f32[8,16], index: 0, kind: input, shape index: {}]
  %s1 = inlined_call_operand.vmem [shape: f32[8,8], index: 1, kind: input, shape index: {}]
  %s2 = inlined_call_operand.vmem [shape: bf16[16,512], index: 2, kind: input, shape index: {}]
  %s3 = inlined_call_operand.vmem [shape: bf16[8,512], index: 3, kind: input, shape index: {}]
  %s4 = inlined_call_operand.vmem [shape: f32[1,512], index: 4, kind: input, shape index: {}]
  %s5 = inlined_call_operand.vmem [shape: bf16[256,256], index: 5, kind: input, shape index: {}]
  %s6 = inlined_call_operand.vmem [shape: f32[1,256], index: 6, kind: input, shape index: {}]
  %s7 = inlined_call_operand.vmem [shape: bf16[256,256], index: 7, kind: input, shape index: {}]
  %s8 = inlined_call_operand.vmem [shape: f32[1,256], index: 8, kind: input, shape index: {}]
  %s9 = inlined_call_operand.vmem [shape: bf16[256,2], index: 9, kind: input, shape index: {}]
  %s10 = inlined_call_operand.vmem [shape: bf16[256,2], index: 10, kind: input, shape index: {}]
  %s11 = inlined_call_operand.vmem [shape: f32[1,2], index: 11, kind: input, shape index: {}]
  %s12 = inlined_call_operand.vmem [shape: f32[8,2], index: 12, kind: output, shape index: {}]
  %s13 = sld [smem:[#allocation0]]
  $region58: #{critic_forward.1} parent=0
    _
  %s15 = ssub.s32 1, %s13
  %s16 = scalar_select 0, %s15, %s13
  // Predicated region
  $region2: #{critic_forward.1} parent=0 // pred_check
    _
  $region3: #{critic_forward.1} parent=0 // pred_check_branch
    %18 = sbr.rel (0) target = $region5
  $region4: #{critic_forward.1} parent=0 // pred_region
    _
  $region5: #{critic_forward.1} parent=0 // pred_fallthru
    _
  // Predicated region
  $region6: #{critic_forward.1} parent=0 // pred_check
    _
  $region7: #{critic_forward.1} parent=0 // pred_check_branch
    %20 = sbr.rel (0) target = $region9
  $region8: #{critic_forward.1} parent=0 // pred_region
    _
  $region9: #{critic_forward.1} parent=0 // pred_fallthru
    _
  // Predicated region
  $region10: #{critic_forward.1} parent=0 // pred_check
    _
  $region11: #{critic_forward.1} parent=0 // pred_check_branch
    %22 = sbr.rel (0) target = $region13
  $region12: #{critic_forward.1} parent=0 // pred_region
    _
  $region13: #{critic_forward.1} parent=0 // pred_fallthru
    _
  // Predicated region
  $region14: #{critic_forward.1} parent=0 // pred_check
    _
  $region15: #{critic_forward.1} parent=0 // pred_check_branch
    %24 = sbr.rel (0) target = $region17
  $region16: #{critic_forward.1} parent=0 // pred_region
    _
  $region17: #{critic_forward.1} parent=0 // pred_fallthru
    _
  // Predicated region
  $region18: #{critic_forward.1} parent=0 // pred_check
    _
  $region19: #{critic_forward.1} parent=0 // pred_check_branch
    %26 = sbr.rel (0) target = $region21
  $region20: #{critic_forward.1} parent=0 // pred_region
    _
  $region21: #{critic_forward.1} parent=0 // pred_fallthru
    _
  // Predicated region
  $region22: #{critic_forward.1} parent=0 // pred_check
    _
  $region23: #{critic_forward.1} parent=0 // pred_check_branch
    %28 = sbr.rel (0) target = $region25
  $region24: #{critic_forward.1} parent=0 // pred_region
    _
  $region25: #{critic_forward.1} parent=0 // pred_fallthru
    _
  // Predicated region
  $region26: #{critic_forward.1} parent=0 // pred_check
    _
  $region27: #{critic_forward.1} parent=0 // pred_check_branch
    %30 = sbr.rel (0) target = $region29
  $region28: #{critic_forward.1} parent=0 // pred_region
    _
  $region29: #{critic_forward.1} parent=0 // pred_fallthru
    _
  // Predicated region
  $region30: #{critic_forward.1} parent=0 // pred_check
    _
  $region31: #{critic_forward.1} parent=0 // pred_check_branch
    %32 = sbr.rel (0) target = $region33
  $region32: #{critic_forward.1} parent=0 // pred_region
    _
  $region33: #{critic_forward.1} parent=0 // pred_fallthru
    _
  // Predicated region
  $region34: #{critic_forward.1} parent=0 // pred_check
    _
  $region35: #{critic_forward.1} parent=0 // pred_check_branch
    %34 = sbr.rel (0) target = $region37
  $region36: #{critic_forward.1} parent=0 // pred_region
    _
  $region37: #{critic_forward.1} parent=0 // pred_fallthru
    _
  // Predicated region
  $region38: #{critic_forward.1} parent=0 // pred_check
    _
  $region39: #{critic_forward.1} parent=0 // pred_check_branch
    %36 = sbr.rel (0) target = $region41
  $region40: #{critic_forward.1} parent=0 // pred_region
    _
  $region41: #{critic_forward.1} parent=0 // pred_fallthru
    _
  // Predicated region
  $region42: #{critic_forward.1} parent=0 // pred_check
    _
  $region43: #{critic_forward.1} parent=0 // pred_check_branch
    %38 = sbr.rel (0) target = $region45
  $region44: #{critic_forward.1} parent=0 // pred_region
    _
  $region45: #{critic_forward.1} parent=0 // pred_fallthru
    _
  // Predicated region
  $region46: #{critic_forward.1} parent=0 // pred_check
    _
  $region47: #{critic_forward.1} parent=0 // pred_check_branch
    %40 = sbr.rel (0) target = $region49
  $region48: #{critic_forward.1} parent=0 // pred_region
    _
  $region49: #{critic_forward.1} parent=0 // pred_fallthru
    _
  %v42 = vld [vmem:[%s0] sm:$0xff]
  %v43 = vld [vmem:[%s1] sm:$0xff]
  %vm44 = vcmask 130048
  %v45 = vsel %vm44, %v42, 0.0
  %46 = vadd.xlane.f32.xlu0 %v45
  %v47 = vpop.xlane.xlu0 %46
  %vm48 = vcmask 64512
  %v49 = vsel %vm48, %v43, 0.0
  %50 = vadd.xlane.f32.xlu0 %v49
  %v51 = vpop.xlane.xlu0 %50
  %v52 = vadd.f32 %v47, %v51
  %v53 = vmul.f32 %v52, 0.041666668
  %v54 = vsub.f32 %v42, %v53
  %v55 = vmul.f32 %v54, %v54
  %v56 = vsel %vm44, %v55, 0.0
  %57 = vadd.xlane.f32.xlu0 %v56
  %v58 = vpop.xlane.xlu0 %57
  %v59 = vsub.f32 %v43, %v53
  %v60 = vmul.f32 %v59, %v59
  %v61 = vsel %vm48, %v60, 0.0
  %62 = vadd.xlane.f32.xlu0 %v61
  %v63 = vpop.xlane.xlu0 %62
  %v64 = vadd.f32 %v58, %v63
  %v65 = vmul.f32 %v64, 0.041666668
  %v66 = vadd.f32 %v65, 1e-05
  %v67 = vrsqrt.pop %v66
  %v68 = vmul.f32 %v54, %v67
  %v69 = vpack.c.bf16 %v68, %v68
  %v70 = vmul.f32 %v59, %v67
  %v71 = vpack.c.bf16 %v70, %v70
  %v72 = vld [vmem:[%s2] sm:$0xff]
  %v73 = vld [vmem:[%s2 + $0x8] sm:$0xff]
  %v74 = vld [vmem:[%s2 + $0x10] sm:$0xff]
  %v75 = vld [vmem:[%s2 + $0x18] sm:$0xff]
  %v76 = vld [vmem:[%s3] sm:$0xff]
  %v77 = vld [vmem:[%s3 + $0x8] sm:$0xff]
  %v80 = vunpack.c.l.b16 %v76
  %v81 = vunpack.c.h.b16 %v76
  %v82 = vunpack.c.l.b16 %v77
  %v83 = vunpack.c.h.b16 %v77
  %v84 = vpack.c.b16 %v80, %v80
  %v85 = vpack.c.b16 %v81, %v81
  %v86 = vpack.c.b16 %v82, %v82
  %v87 = vpack.c.b16 %v83, %v83
  %v89 = vsel %vm48, %v71, 0
  %vm91 = vcmask 1043456
  %v93 = vsel %vm91, %v84, 0
  %v96 = vsel %vm91, %v85, 0
  %v99 = vsel %vm91, %v86, 0
  %v102 = vsel %vm91, %v87, 0
  %104 = vmatprep.subr.bf16.mxu0 0
  %105 = vmatpush1.bf16.msra.mxu0 0
  %106 = vmatprep.subr.bf16.mxu0 0
  %107 = vmatpush1.bf16.msra.mxu0 0
  %108 = vmatprep.subr.bf16.mxu0 0
  %109 = vmatpush1.bf16.msra.mxu0 0
  %110 = vmatprep.subr.bf16.mxu0 0
  %111 = vmatpush1.bf16.msra.mxu0 0
  %112 = vmatprep.subr.bf16.mxu0 0
  %113 = vmatpush1.bf16.msra.mxu0 0
  %114 = vmatprep.subr.bf16.mxu0 0
  %115 = vmatpush1.bf16.msra.mxu0 0
  %116 = vmatprep.subr.bf16.mxu0 0
  %117 = vmatpush1.bf16.msra.mxu0 0
  %118 = vmatprep.subr.bf16.mxu0 %v96
  %119 = vmatpush1.bf16.msra.mxu0 %v93
  %120 = vmatprep.subr.bf16.mxu0 0
  %121 = vmatpush2.bf16.msra.mxu0 0
  %122 = vmatprep.subr.bf16.mxu0 0
  %123 = vmatpush2.bf16.msra.mxu0 0
  %124 = vmatprep.subr.bf16.mxu0 0
  %125 = vmatpush2.bf16.msra.mxu0 0
  %126 = vmatprep.subr.bf16.mxu0 0
  %127 = vmatpush2.bf16.msra.mxu0 0
  %128 = vmatprep.subr.bf16.mxu0 0
  %129 = vmatpush2.bf16.msra.mxu0 0
  %130 = vmatprep.subr.bf16.mxu0 0
  %131 = vmatpush2.bf16.msra.mxu0 0
  %132 = vmatprep.subr.bf16.mxu0 0
  %133 = vmatpush2.bf16.msra.mxu0 0
  %134 = vmatprep.subr.bf16.mxu0 0
  %135 = vmatpush2.bf16.msra.mxu0 0
  %136 = vmatprep.mubr.bf16.mxu0 0
  %137 = vmatmul.mubr.bf16.gmra.mxu0 %v89
  %v138 = vpop.f32.mrf.mxu0
  %v139 = vadd.f32 0.0, %v138
  %v140 = vpop.f32.mrf.mxu0
  %v141 = vadd.f32 0.0, %v140
  %v142 = vpop.f32.mrf.mxu0
  %v143 = vpop.f32.mrf.mxu0
  %144 = vdwg.mxu0
  %145 = vmatprep.subr.bf16.mxu0 0
  %146 = vmatpush1.bf16.msra.mxu0 0
  %147 = vmatprep.subr.bf16.mxu0 0
  %148 = vmatpush1.bf16.msra.mxu0 0
  %149 = vmatprep.subr.bf16.mxu0 0
  %150 = vmatpush1.bf16.msra.mxu0 0
  %151 = vmatprep.subr.bf16.mxu0 0
  %152 = vmatpush1.bf16.msra.mxu0 0
  %153 = vmatprep.subr.bf16.mxu0 0
  %154 = vmatpush1.bf16.msra.mxu0 0
  %155 = vmatprep.subr.bf16.mxu0 0
  %156 = vmatpush1.bf16.msra.mxu0 0
  %157 = vmatprep.subr.bf16.mxu0 0
  %158 = vmatpush1.bf16.msra.mxu0 0
  %159 = vmatprep.subr.bf16.mxu0 %v102
  %160 = vmatpush1.bf16.msra.mxu0 %v99
  %161 = vmatprep.subr.bf16.mxu0 0
  %162 = vmatpush2.bf16.msra.mxu0 0
  %163 = vmatprep.subr.bf16.mxu0 0
  %164 = vmatpush2.bf16.msra.mxu0 0
  %165 = vmatprep.subr.bf16.mxu0 0
  %166 = vmatpush2.bf16.msra.mxu0 0
  %167 = vmatprep.subr.bf16.mxu0 0
  %168 = vmatpush2.bf16.msra.mxu0 0
  %169 = vmatprep.subr.bf16.mxu0 0
  %170 = vmatpush2.bf16.msra.mxu0 0
  %171 = vmatprep.subr.bf16.mxu0 0
  %172 = vmatpush2.bf16.msra.mxu0 0
  %173 = vmatprep.subr.bf16.mxu0 0
  %174 = vmatpush2.bf16.msra.mxu0 0
  %175 = vmatprep.subr.bf16.mxu0 0
  %176 = vmatpush2.bf16.msra.mxu0 0
  %177 = vmatprep.mubr.bf16.mxu0 0
  %178 = vmatmul.mubr.bf16.gmra.mxu0 %v89
  %v179 = vpop.f32.mrf.mxu0
  %v180 = vadd.f32 0.0, %v179
  %v181 = vpop.f32.mrf.mxu0
  %v182 = vadd.f32 0.0, %v181
  %v183 = vpop.f32.mrf.mxu0
  %v184 = vpop.f32.mrf.mxu0
  %185 = vdwg.mxu0
  %v190 = vunpack.c.l.b16 %v72
  %v191 = vunpack.c.h.b16 %v72
  %v192 = vunpack.c.l.b16 %v73
  %v193 = vunpack.c.h.b16 %v73
  %v194 = vunpack.c.l.b16 %v74
  %v195 = vunpack.c.h.b16 %v74
  %v196 = vunpack.c.l.b16 %v75
  %v197 = vunpack.c.h.b16 %v75
  %v198 = vpack.c.b16 %v194, %v190
  %v199 = vpack.c.b16 %v195, %v191
  %v200 = vpack.c.b16 %v196, %v192
  %v201 = vpack.c.b16 %v197, %v193
  %v207 = vsel %vm44, %v69, 0
  %209 = vmatprep.subr.bf16.mxu0 0
  %210 = vmatpush1.bf16.msra.mxu0 0
  %211 = vmatprep.subr.bf16.mxu0 0
  %212 = vmatpush1.bf16.msra.mxu0 0
  %213 = vmatprep.subr.bf16.mxu0 0
  %214 = vmatpush1.bf16.msra.mxu0 0
  %215 = vmatprep.subr.bf16.mxu0 0
  %216 = vmatpush1.bf16.msra.mxu0 0
  %217 = vmatprep.subr.bf16.mxu0 0
  %218 = vmatpush1.bf16.msra.mxu0 0
  %219 = vmatprep.subr.bf16.mxu0 0
  %220 = vmatpush1.bf16.msra.mxu0 0
  %221 = vmatprep.subr.bf16.mxu0 0
  %222 = vmatpush1.bf16.msra.mxu0 0
  %223 = vmatprep.subr.bf16.mxu0 %v199
  %224 = vmatpush1.bf16.msra.mxu0 %v198
  %225 = vmatprep.subr.bf16.mxu0 0
  %226 = vmatpush2.bf16.msra.mxu0 0
  %227 = vmatprep.subr.bf16.mxu0 0
  %228 = vmatpush2.bf16.msra.mxu0 0
  %229 = vmatprep.subr.bf16.mxu0 0
  %230 = vmatpush2.bf16.msra.mxu0 0
  %231 = vmatprep.subr.bf16.mxu0 0
  %232 = vmatpush2.bf16.msra.mxu0 0
  %233 = vmatprep.subr.bf16.mxu0 0
  %234 = vmatpush2.bf16.msra.mxu0 0
  %235 = vmatprep.subr.bf16.mxu0 0
  %236 = vmatpush2.bf16.msra.mxu0 0
  %237 = vmatprep.subr.bf16.mxu0 0
  %238 = vmatpush2.bf16.msra.mxu0 0
  %239 = vmatprep.subr.bf16.mxu0 0
  %240 = vmatpush2.bf16.msra.mxu0 0
  %241 = vmatprep.mubr.bf16.mxu0 0
  %242 = vmatmul.mubr.bf16.gmra.mxu0 %v207
  %v243 = vpop.f32.mrf.mxu0
  %v244 = vadd.f32 %v139, %v243
  %v245 = vpop.f32.mrf.mxu0
  %v246 = vadd.f32 %v141, %v245
  %v247 = vpop.f32.mrf.mxu0
  %v248 = vpop.f32.mrf.mxu0
  %249 = vdwg.mxu0
  %250 = vmatprep.subr.bf16.mxu0 0
  %251 = vmatpush1.bf16.msra.mxu0 0
  %252 = vmatprep.subr.bf16.mxu0 0
  %253 = vmatpush1.bf16.msra.mxu0 0
  %254 = vmatprep.subr.bf16.mxu0 0
  %255 = vmatpush1.bf16.msra.mxu0 0
  %256 = vmatprep.subr.bf16.mxu0 0
  %257 = vmatpush1.bf16.msra.mxu0 0
  %258 = vmatprep.subr.bf16.mxu0 0
  %259 = vmatpush1.bf16.msra.mxu0 0
  %260 = vmatprep.subr.bf16.mxu0 0
  %261 = vmatpush1.bf16.msra.mxu0 0
  %262 = vmatprep.subr.bf16.mxu0 0
  %263 = vmatpush1.bf16.msra.mxu0 0
  %264 = vmatprep.subr.bf16.mxu0 %v201
  %265 = vmatpush1.bf16.msra.mxu0 %v200
  %266 = vmatprep.subr.bf16.mxu0 0
  %267 = vmatpush2.bf16.msra.mxu0 0
  %268 = vmatprep.subr.bf16.mxu0 0
  %269 = vmatpush2.bf16.msra.mxu0 0
  %270 = vmatprep.subr.bf16.mxu0 0
  %271 = vmatpush2.bf16.msra.mxu0 0
  %272 = vmatprep.subr.bf16.mxu0 0
  %273 = vmatpush2.bf16.msra.mxu0 0
  %274 = vmatprep.subr.bf16.mxu0 0
  %275 = vmatpush2.bf16.msra.mxu0 0
  %276 = vmatprep.subr.bf16.mxu0 0
  %277 = vmatpush2.bf16.msra.mxu0 0
  %278 = vmatprep.subr.bf16.mxu0 0
  %279 = vmatpush2.bf16.msra.mxu0 0
  %280 = vmatprep.subr.bf16.mxu0 0
  %281 = vmatpush2.bf16.msra.mxu0 0
  %282 = vmatprep.mubr.bf16.mxu0 0
  %283 = vmatmul.mubr.bf16.gmra.mxu0 %v207
  %v284 = vpop.f32.mrf.mxu0
  %v285 = vadd.f32 %v180, %v284
  %v286 = vpop.f32.mrf.mxu0
  %v287 = vadd.f32 %v182, %v286
  %v288 = vpop.f32.mrf.mxu0
  %v289 = vpop.f32.mrf.mxu0
  %290 = vdwg.mxu0
  %v291 = vld [vmem:[%s4] sm:$0xf]
  %v293 = vlaneseq
  %v294 = vshrl.u32 %v293, 7
  %v295 = vsub.s32 0, %v294
  %v296 = vrot.slane %v291, %v295
  %v297 = vlaneseq
  %v298 = vshrl.u32 %v297, 7
  %v299 = vsub.s32 1, %v298
  %v300 = vrot.slane %v291, %v299
  %v301 = vlaneseq
  %v302 = vshrl.u32 %v301, 7
  %v303 = vsub.s32 2, %v302
  %v304 = vrot.slane %v291, %v303
  %v305 = vlaneseq
  %v306 = vshrl.u32 %v305, 7
  %v307 = vsub.s32 3, %v306
  %v308 = vrot.slane %v291, %v307
  %v313 = vadd.f32 %v244, %v296
  %v314 = vadd.f32 %v246, %v300
  %v315 = vadd.f32 %v285, %v304
  %v316 = vadd.f32 %v287, %v308
  %v317 = vmax.f32 %v313, 0.0
  %v318 = vmax.f32 %v314, 0.0
  %v319 = vmax.f32 %v315, 0.0
  %v320 = vmax.f32 %v316, 0.0
  %v321 = vadd.f32 %v317, %v318
  %322 = vadd.xlane.f32.xlu0 %v321
  %v323 = vpop.xlane.xlu0 %322
  %v324 = vrcp.pop 256.0
  %v325 = vmul.f32 %v323, %v324
  %v326 = vsub.f32 %v317, %v325
  %v327 = vsub.f32 %v318, %v325
  %v328 = vmul.f32 %v326, %v326
  %v329 = vmul.f32 %v327, %v327
  %v330 = vadd.f32 %v328, %v329
  %331 = vadd.xlane.f32.xlu0 %v330
  %v332 = vpop.xlane.xlu0 %331
  %v333 = vmul.f32 %v332, %v324
  %v334 = vadd.f32 %v333, 1e-05
  %v335 = vrsqrt.pop %v334
  %v336 = vmul.f32 %v326, %v335
  %v337 = vmul.f32 %v327, %v335
  %v338 = vpack.c.bf16 %v336, %v336
  %v339 = vpack.c.bf16 %v337, %v337
  %v340 = vld [vmem:[%s5] sm:$0xff]
  %v341 = vld [vmem:[%s5 + $0x8] sm:$0xff]
  %v342 = vld [vmem:[%s5 + $0x10] sm:$0xff]
  %v343 = vld [vmem:[%s5 + $0x18] sm:$0xff]
  %v344 = vld [vmem:[%s5 + $0x20] sm:$0xff]
  %v345 = vld [vmem:[%s5 + $0x28] sm:$0xff]
  %v346 = vld [vmem:[%s5 + $0x30] sm:$0xff]
  %v347 = vld [vmem:[%s5 + $0x38] sm:$0xff]
  %v348 = vld [vmem:[%s5 + $0x40] sm:$0xff]
  %v349 = vld [vmem:[%s5 + $0x48] sm:$0xff]
  %v350 = vld [vmem:[%s5 + $0x50] sm:$0xff]
  %v351 = vld [vmem:[%s5 + $0x58] sm:$0xff]
  %v352 = vld [vmem:[%s5 + $0x60] sm:$0xff]
  %v353 = vld [vmem:[%s5 + $0x68] sm:$0xff]
  %v354 = vld [vmem:[%s5 + $0x70] sm:$0xff]
  %v355 = vld [vmem:[%s5 + $0x78] sm:$0xff]
  %v356 = vld [vmem:[%s5 + $0x80] sm:$0xff]
  %v357 = vld [vmem:[%s5 + $0x88] sm:$0xff]
  %v358 = vld [vmem:[%s5 + $0x90] sm:$0xff]
  %v359 = vld [vmem:[%s5 + $0x98] sm:$0xff]
  %v360 = vld [vmem:[%s5 + $0xa0] sm:$0xff]
  %v361 = vld [vmem:[%s5 + $0xa8] sm:$0xff]
  %v362 = vld [vmem:[%s5 + $0xb0] sm:$0xff]
  %v363 = vld [vmem:[%s5 + $0xb8] sm:$0xff]
  %v364 = vld [vmem:[%s5 + $0xc0] sm:$0xff]
  %v365 = vld [vmem:[%s5 + $0xc8] sm:$0xff]
  %v366 = vld [vmem:[%s5 + $0xd0] sm:$0xff]
  %v367 = vld [vmem:[%s5 + $0xd8] sm:$0xff]
  %v368 = vld [vmem:[%s5 + $0xe0] sm:$0xff]
  %v369 = vld [vmem:[%s5 + $0xe8] sm:$0xff]
  %v370 = vld [vmem:[%s5 + $0xf0] sm:$0xff]
  %v371 = vld [vmem:[%s5 + $0xf8] sm:$0xff]
  %v372 = vld [vmem:[%s6] sm:$0x3]
  %v374 = vlaneseq
  %v375 = vshrl.u32 %v374, 7
  %v376 = vsub.s32 0, %v375
  %v377 = vrot.slane %v372, %v376
  %v378 = vlaneseq
  %v379 = vshrl.u32 %v378, 7
  %v380 = vsub.s32 1, %v379
  %v381 = vrot.slane %v372, %v380
  %v416 = vunpack.c.l.b16 %v340
  %v417 = vunpack.c.h.b16 %v340
  %v418 = vunpack.c.l.b16 %v341
  %v419 = vunpack.c.h.b16 %v341
  %v420 = vunpack.c.l.b16 %v342
  %v421 = vunpack.c.h.b16 %v342
  %v422 = vunpack.c.l.b16 %v343
  %v423 = vunpack.c.h.b16 %v343
  %v424 = vunpack.c.l.b16 %v344
  %v425 = vunpack.c.h.b16 %v344
  %v426 = vunpack.c.l.b16 %v345
  %v427 = vunpack.c.h.b16 %v345
  %v428 = vunpack.c.l.b16 %v346
  %v429 = vunpack.c.h.b16 %v346
  %v430 = vunpack.c.l.b16 %v347
  %v431 = vunpack.c.h.b16 %v347
  %v432 = vunpack.c.l.b16 %v348
  %v433 = vunpack.c.h.b16 %v348
  %v434 = vunpack.c.l.b16 %v349
  %v435 = vunpack.c.h.b16 %v349
  %v436 = vunpack.c.l.b16 %v350
  %v437 = vunpack.c.h.b16 %v350
  %v438 = vunpack.c.l.b16 %v351
  %v439 = vunpack.c.h.b16 %v351
  %v440 = vunpack.c.l.b16 %v352
  %v441 = vunpack.c.h.b16 %v352
  %v442 = vunpack.c.l.b16 %v353
  %v443 = vunpack.c.h.b16 %v353
  %v444 = vunpack.c.l.b16 %v354
  %v445 = vunpack.c.h.b16 %v354
  %v446 = vunpack.c.l.b16 %v355
  %v447 = vunpack.c.h.b16 %v355
  %v448 = vunpack.c.l.b16 %v356
  %v449 = vunpack.c.h.b16 %v356
  %v450 = vunpack.c.l.b16 %v357
  %v451 = vunpack.c.h.b16 %v357
  %v452 = vunpack.c.l.b16 %v358
  %v453 = vunpack.c.h.b16 %v358
  %v454 = vunpack.c.l.b16 %v359
  %v455 = vunpack.c.h.b16 %v359
  %v456 = vunpack.c.l.b16 %v360
  %v457 = vunpack.c.h.b16 %v360
  %v458 = vunpack.c.l.b16 %v361
  %v459 = vunpack.c.h.b16 %v361
  %v460 = vunpack.c.l.b16 %v362
  %v461 = vunpack.c.h.b16 %v362
  %v462 = vunpack.c.l.b16 %v363
  %v463 = vunpack.c.h.b16 %v363
  %v464 = vunpack.c.l.b16 %v364
  %v465 = vunpack.c.h.b16 %v364
  %v466 = vunpack.c.l.b16 %v365
  %v467 = vunpack.c.h.b16 %v365
  %v468 = vunpack.c.l.b16 %v366
  %v469 = vunpack.c.h.b16 %v366
  %v470 = vunpack.c.l.b16 %v367
  %v471 = vunpack.c.h.b16 %v367
  %v472 = vunpack.c.l.b16 %v368
  %v473 = vunpack.c.h.b16 %v368
  %v474 = vunpack.c.l.b16 %v369
  %v475 = vunpack.c.h.b16 %v369
  %v476 = vunpack.c.l.b16 %v370
  %v477 = vunpack.c.h.b16 %v370
  %v478 = vunpack.c.l.b16 %v371
  %v479 = vunpack.c.h.b16 %v371
  %v480 = vpack.c.b16 %v418, %v416
  %v481 = vpack.c.b16 %v419, %v417
  %v482 = vpack.c.b16 %v422, %v420
  %v483 = vpack.c.b16 %v423, %v421
  %v484 = vpack.c.b16 %v426, %v424
  %v485 = vpack.c.b16 %v427, %v425
  %v486 = vpack.c.b16 %v430, %v428
  %v487 = vpack.c.b16 %v431, %v429
  %v488 = vpack.c.b16 %v434, %v432
  %v489 = vpack.c.b16 %v435, %v433
  %v490 = vpack.c.b16 %v438, %v436
  %v491 = vpack.c.b16 %v439, %v437
  %v492 = vpack.c.b16 %v442, %v440
  %v493 = vpack.c.b16 %v443, %v441
  %v494 = vpack.c.b16 %v446, %v444
  %v495 = vpack.c.b16 %v447, %v445
  %v496 = vpack.c.b16 %v450, %v448
  %v497 = vpack.c.b16 %v451, %v449
  %v498 = vpack.c.b16 %v454, %v452
  %v499 = vpack.c.b16 %v455, %v453
  %v500 = vpack.c.b16 %v458, %v456
  %v501 = vpack.c.b16 %v459, %v457
  %v502 = vpack.c.b16 %v462, %v460
  %v503 = vpack.c.b16 %v463, %v461
  %v504 = vpack.c.b16 %v466, %v464
  %v505 = vpack.c.b16 %v467, %v465
  %v506 = vpack.c.b16 %v470, %v468
  %v507 = vpack.c.b16 %v471, %v469
  %v508 = vpack.c.b16 %v474, %v472
  %v509 = vpack.c.b16 %v475, %v473
  %v510 = vpack.c.b16 %v478, %v476
  %v511 = vpack.c.b16 %v479, %v477
  %544 = vmatprep.subr.bf16.mxu0 %v495
  %545 = vmatpush1.bf16.msra.mxu0 %v494
  %546 = vmatprep.subr.bf16.mxu0 %v493
  %547 = vmatpush1.bf16.msra.mxu0 %v492
  %548 = vmatprep.subr.bf16.mxu0 %v491
  %549 = vmatpush1.bf16.msra.mxu0 %v490
  %550 = vmatprep.subr.bf16.mxu0 %v489
  %551 = vmatpush1.bf16.msra.mxu0 %v488
  %552 = vmatprep.subr.bf16.mxu0 %v487
  %553 = vmatpush1.bf16.msra.mxu0 %v486
  %554 = vmatprep.subr.bf16.mxu0 %v485
  %555 = vmatpush1.bf16.msra.mxu0 %v484
  %556 = vmatprep.subr.bf16.mxu0 %v483
  %557 = vmatpush1.bf16.msra.mxu0 %v482
  %558 = vmatprep.subr.bf16.mxu0 %v481
  %559 = vmatpush1.bf16.msra.mxu0 %v480
  %560 = vmatprep.subr.bf16.mxu0 %v511
  %561 = vmatpush2.bf16.msra.mxu0 %v510
  %562 = vmatprep.subr.bf16.mxu0 %v509
  %563 = vmatpush2.bf16.msra.mxu0 %v508
  %564 = vmatprep.subr.bf16.mxu0 %v507
  %565 = vmatpush2.bf16.msra.mxu0 %v506
  %566 = vmatprep.subr.bf16.mxu0 %v505
  %567 = vmatpush2.bf16.msra.mxu0 %v504
  %568 = vmatprep.subr.bf16.mxu0 %v503
  %569 = vmatpush2.bf16.msra.mxu0 %v502
  %570 = vmatprep.subr.bf16.mxu0 %v501
  %571 = vmatpush2.bf16.msra.mxu0 %v500
  %572 = vmatprep.subr.bf16.mxu0 %v499
  %573 = vmatpush2.bf16.msra.mxu0 %v498
  %574 = vmatprep.subr.bf16.mxu0 %v497
  %575 = vmatpush2.bf16.msra.mxu0 %v496
  %576 = vmatprep.mubr.bf16.mxu0 %v339
  %577 = vmatmul.mubr.bf16.gmra.mxu0 %v338
  %v578 = vpop.f32.mrf.mxu0
  %v579 = vadd.f32 %v377, %v578
  %v580 = vpop.f32.mrf.mxu0
  %v581 = vadd.f32 %v381, %v580
  %v582 = vpop.f32.mrf.mxu0
  %v583 = vpop.f32.mrf.mxu0
  %584 = vdwg.mxu0
  %v585 = vmax.f32 %v579, 0.0
  %v586 = vmax.f32 %v581, 0.0
  %v587 = vadd.f32 %v319, %v320
  %588 = vadd.xlane.f32.xlu0 %v587
  %v589 = vpop.xlane.xlu0 %588
  %v590 = vmul.f32 %v589, %v324
  %v591 = vsub.f32 %v319, %v590
  %v592 = vsub.f32 %v320, %v590
  %v593 = vmul.f32 %v591, %v591
  %v594 = vmul.f32 %v592, %v592
  %v595 = vadd.f32 %v593, %v594
  %596 = vadd.xlane.f32.xlu0 %v595
  %v597 = vpop.xlane.xlu0 %596
  %v598 = vmul.f32 %v597, %v324
  %v599 = vadd.f32 %v598, 1e-05
  %v600 = vrsqrt.pop %v599
  %v601 = vmul.f32 %v591, %v600
  %v602 = vmul.f32 %v592, %v600
  %v603 = vpack.c.bf16 %v601, %v601
  %v604 = vpack.c.bf16 %v602, %v602
  %v605 = vld [vmem:[%s7] sm:$0xff]
  %v606 = vld [vmem:[%s7 + $0x8] sm:$0xff]
  %v607 = vld [vmem:[%s7 + $0x10] sm:$0xff]
  %v608 = vld [vmem:[%s7 + $0x18] sm:$0xff]
  %v609 = vld [vmem:[%s7 + $0x20] sm:$0xff]
  %v610 = vld [vmem:[%s7 + $0x28] sm:$0xff]
  %v611 = vld [vmem:[%s7 + $0x30] sm:$0xff]
  %v612 = vld [vmem:[%s7 + $0x38] sm:$0xff]
  %v613 = vld [vmem:[%s7 + $0x40] sm:$0xff]
  %v614 = vld [vmem:[%s7 + $0x48] sm:$0xff]
  %v615 = vld [vmem:[%s7 + $0x50] sm:$0xff]
  %v616 = vld [vmem:[%s7 + $0x58] sm:$0xff]
  %v617 = vld [vmem:[%s7 + $0x60] sm:$0xff]
  %v618 = vld [vmem:[%s7 + $0x68] sm:$0xff]
  %v619 = vld [vmem:[%s7 + $0x70] sm:$0xff]
  %v620 = vld [vmem:[%s7 + $0x78] sm:$0xff]
  %v621 = vld [vmem:[%s7 + $0x80] sm:$0xff]
  %v622 = vld [vmem:[%s7 + $0x88] sm:$0xff]
  %v623 = vld [vmem:[%s7 + $0x90] sm:$0xff]
  %v624 = vld [vmem:[%s7 + $0x98] sm:$0xff]
  %v625 = vld [vmem:[%s7 + $0xa0] sm:$0xff]
  %v626 = vld [vmem:[%s7 + $0xa8] sm:$0xff]
  %v627 = vld [vmem:[%s7 + $0xb0] sm:$0xff]
  %v628 = vld [vmem:[%s7 + $0xb8] sm:$0xff]
  %v629 = vld [vmem:[%s7 + $0xc0] sm:$0xff]
  %v630 = vld [vmem:[%s7 + $0xc8] sm:$0xff]
  %v631 = vld [vmem:[%s7 + $0xd0] sm:$0xff]
  %v632 = vld [vmem:[%s7 + $0xd8] sm:$0xff]
  %v633 = vld [vmem:[%s7 + $0xe0] sm:$0xff]
  %v634 = vld [vmem:[%s7 + $0xe8] sm:$0xff]
  %v635 = vld [vmem:[%s7 + $0xf0] sm:$0xff]
  %v636 = vld [vmem:[%s7 + $0xf8] sm:$0xff]
  %v637 = vld [vmem:[%s8] sm:$0x3]
  %v639 = vlaneseq
  %v640 = vshrl.u32 %v639, 7
  %v641 = vsub.s32 0, %v640
  %v642 = vrot.slane %v637, %v641
  %v643 = vlaneseq
  %v644 = vshrl.u32 %v643, 7
  %v645 = vsub.s32 1, %v644
  %v646 = vrot.slane %v637, %v645
  %v681 = vunpack.c.l.b16 %v605
  %v682 = vunpack.c.h.b16 %v605
  %v683 = vunpack.c.l.b16 %v606
  %v684 = vunpack.c.h.b16 %v606
  %v685 = vunpack.c.l.b16 %v607
  %v686 = vunpack.c.h.b16 %v607
  %v687 = vunpack.c.l.b16 %v608
  %v688 = vunpack.c.h.b16 %v608
  %v689 = vunpack.c.l.b16 %v609
  %v690 = vunpack.c.h.b16 %v609
  %v691 = vunpack.c.l.b16 %v610
  %v692 = vunpack.c.h.b16 %v610
  %v693 = vunpack.c.l.b16 %v611
  %v694 = vunpack.c.h.b16 %v611
  %v695 = vunpack.c.l.b16 %v612
  %v696 = vunpack.c.h.b16 %v612
  %v697 = vunpack.c.l.b16 %v613
  %v698 = vunpack.c.h.b16 %v613
  %v699 = vunpack.c.l.b16 %v614
  %v700 = vunpack.c.h.b16 %v614
  %v701 = vunpack.c.l.b16 %v615
  %v702 = vunpack.c.h.b16 %v615
  %v703 = vunpack.c.l.b16 %v616
  %v704 = vunpack.c.h.b16 %v616
  %v705 = vunpack.c.l.b16 %v617
  %v706 = vunpack.c.h.b16 %v617
  %v707 = vunpack.c.l.b16 %v618
  %v708 = vunpack.c.h.b16 %v618
  %v709 = vunpack.c.l.b16 %v619
  %v710 = vunpack.c.h.b16 %v619
  %v711 = vunpack.c.l.b16 %v620
  %v712 = vunpack.c.h.b16 %v620
  %v713 = vunpack.c.l.b16 %v621
  %v714 = vunpack.c.h.b16 %v621
  %v715 = vunpack.c.l.b16 %v622
  %v716 = vunpack.c.h.b16 %v622
  %v717 = vunpack.c.l.b16 %v623
  %v718 = vunpack.c.h.b16 %v623
  %v719 = vunpack.c.l.b16 %v624
  %v720 = vunpack.c.h.b16 %v624
  %v721 = vunpack.c.l.b16 %v625
  %v722 = vunpack.c.h.b16 %v625
  %v723 = vunpack.c.l.b16 %v626
  %v724 = vunpack.c.h.b16 %v626
  %v725 = vunpack.c.l.b16 %v627
  %v726 = vunpack.c.h.b16 %v627
  %v727 = vunpack.c.l.b16 %v628
  %v728 = vunpack.c.h.b16 %v628
  %v729 = vunpack.c.l.b16 %v629
  %v730 = vunpack.c.h.b16 %v629
  %v731 = vunpack.c.l.b16 %v630
  %v732 = vunpack.c.h.b16 %v630
  %v733 = vunpack.c.l.b16 %v631
  %v734 = vunpack.c.h.b16 %v631
  %v735 = vunpack.c.l.b16 %v632
  %v736 = vunpack.c.h.b16 %v632
  %v737 = vunpack.c.l.b16 %v633
  %v738 = vunpack.c.h.b16 %v633
  %v739 = vunpack.c.l.b16 %v634
  %v740 = vunpack.c.h.b16 %v634
  %v741 = vunpack.c.l.b16 %v635
  %v742 = vunpack.c.h.b16 %v635
  %v743 = vunpack.c.l.b16 %v636
  %v744 = vunpack.c.h.b16 %v636
  %v745 = vpack.c.b16 %v683, %v681
  %v746 = vpack.c.b16 %v684, %v682
  %v747 = vpack.c.b16 %v687, %v685
  %v748 = vpack.c.b16 %v688, %v686
  %v749 = vpack.c.b16 %v691, %v689
  %v750 = vpack.c.b16 %v692, %v690
  %v751 = vpack.c.b16 %v695, %v693
  %v752 = vpack.c.b16 %v696, %v694
  %v753 = vpack.c.b16 %v699, %v697
  %v754 = vpack.c.b16 %v700, %v698
  %v755 = vpack.c.b16 %v703, %v701
  %v756 = vpack.c.b16 %v704, %v702
  %v757 = vpack.c.b16 %v707, %v705
  %v758 = vpack.c.b16 %v708, %v706
  %v759 = vpack.c.b16 %v711, %v709
  %v760 = vpack.c.b16 %v712, %v710
  %v761 = vpack.c.b16 %v715, %v713
  %v762 = vpack.c.b16 %v716, %v714
  %v763 = vpack.c.b16 %v719, %v717
  %v764 = vpack.c.b16 %v720, %v718
  %v765 = vpack.c.b16 %v723, %v721
  %v766 = vpack.c.b16 %v724, %v722
  %v767 = vpack.c.b16 %v727, %v725
  %v768 = vpack.c.b16 %v728, %v726
  %v769 = vpack.c.b16 %v731, %v729
  %v770 = vpack.c.b16 %v732, %v730
  %v771 = vpack.c.b16 %v735, %v733
  %v772 = vpack.c.b16 %v736, %v734
  %v773 = vpack.c.b16 %v739, %v737
  %v774 = vpack.c.b16 %v740, %v738
  %v775 = vpack.c.b16 %v743, %v741
  %v776 = vpack.c.b16 %v744, %v742
  %809 = vmatprep.subr.bf16.mxu0 %v760
  %810 = vmatpush1.bf16.msra.mxu0 %v759
  %811 = vmatprep.subr.bf16.mxu0 %v758
  %812 = vmatpush1.bf16.msra.mxu0 %v757
  %813 = vmatprep.subr.bf16.mxu0 %v756
  %814 = vmatpush1.bf16.msra.mxu0 %v755
  %815 = vmatprep.subr.bf16.mxu0 %v754
  %816 = vmatpush1.bf16.msra.mxu0 %v753
  %817 = vmatprep.subr.bf16.mxu0 %v752
  %818 = vmatpush1.bf16.msra.mxu0 %v751
  %819 = vmatprep.subr.bf16.mxu0 %v750
  %820 = vmatpush1.bf16.msra.mxu0 %v749
  %821 = vmatprep.subr.bf16.mxu0 %v748
  %822 = vmatpush1.bf16.msra.mxu0 %v747
  %823 = vmatprep.subr.bf16.mxu0 %v746
  %824 = vmatpush1.bf16.msra.mxu0 %v745
  %825 = vmatprep.subr.bf16.mxu0 %v776
  %826 = vmatpush2.bf16.msra.mxu0 %v775
  %827 = vmatprep.subr.bf16.mxu0 %v774
  %828 = vmatpush2.bf16.msra.mxu0 %v773
  %829 = vmatprep.subr.bf16.mxu0 %v772
  %830 = vmatpush2.bf16.msra.mxu0 %v771
  %831 = vmatprep.subr.bf16.mxu0 %v770
  %832 = vmatpush2.bf16.msra.mxu0 %v769
  %833 = vmatprep.subr.bf16.mxu0 %v768
  %834 = vmatpush2.bf16.msra.mxu0 %v767
  %835 = vmatprep.subr.bf16.mxu0 %v766
  %836 = vmatpush2.bf16.msra.mxu0 %v765
  %837 = vmatprep.subr.bf16.mxu0 %v764
  %838 = vmatpush2.bf16.msra.mxu0 %v763
  %839 = vmatprep.subr.bf16.mxu0 %v762
  %840 = vmatpush2.bf16.msra.mxu0 %v761
  %841 = vmatprep.mubr.bf16.mxu0 %v604
  %842 = vmatmul.mubr.bf16.gmra.mxu0 %v603
  %v843 = vpop.f32.mrf.mxu0
  %v844 = vadd.f32 %v642, %v843
  %v845 = vpop.f32.mrf.mxu0
  %v846 = vadd.f32 %v646, %v845
  %v847 = vpop.f32.mrf.mxu0
  %v848 = vpop.f32.mrf.mxu0
  %849 = vdwg.mxu0
  %v850 = vmax.f32 %v844, 0.0
  %v851 = vmax.f32 %v846, 0.0
  %v852 = vadd.f32 %v585, %v586
  %853 = vadd.xlane.f32.xlu0 %v852
  %v854 = vpop.xlane.xlu0 %853
  %v855 = vmul.f32 %v854, %v324
  %v856 = vsub.f32 %v585, %v855
  %v857 = vsub.f32 %v586, %v855
  %v858 = vmul.f32 %v856, %v856
  %v859 = vmul.f32 %v857, %v857
  %v860 = vadd.f32 %v858, %v859
  %861 = vadd.xlane.f32.xlu0 %v860
  %v862 = vpop.xlane.xlu0 %861
  %v863 = vmul.f32 %v862, %v324
  %v864 = vadd.f32 %v863, 1e-05
  %v865 = vrsqrt.pop %v864
  %v866 = vmul.f32 %v856, %v865
  %v867 = vmul.f32 %v857, %v865
  %v868 = vpack.c.bf16 %v866, %v866
  %v869 = vpack.c.bf16 %v867, %v867
  %v870 = vadd.f32 %v850, %v851
  %871 = vadd.xlane.f32.xlu0 %v870
  %v872 = vpop.xlane.xlu0 %871
  %v873 = vmul.f32 %v872, %v324
  %v874 = vsub.f32 %v850, %v873
  %v875 = vsub.f32 %v851, %v873
  %v876 = vmul.f32 %v874, %v874
  %v877 = vmul.f32 %v875, %v875
  %v878 = vadd.f32 %v876, %v877
  %879 = vadd.xlane.f32.xlu0 %v878
  %v880 = vpop.xlane.xlu0 %879
  %v881 = vmul.f32 %v880, %v324
  %v882 = vadd.f32 %v881, 1e-05
  %v883 = vrsqrt.pop %v882
  %v884 = vmul.f32 %v874, %v883
  %v885 = vmul.f32 %v875, %v883
  %v886 = vpack.c.bf16 %v884, %v884
  %v887 = vpack.c.bf16 %v885, %v885
  %v888 = vld [vmem:[%s9] sm:$0xf]
  %v889 = vld [vmem:[%s9 + $0x4] sm:$0xf]
  %v890 = vld [vmem:[%s9 + $0x8] sm:$0xf]
  %v891 = vld [vmem:[%s9 + $0xc] sm:$0xf]
  %v892 = vld [vmem:[%s9 + $0x10] sm:$0xf]
  %v893 = vld [vmem:[%s9 + $0x14] sm:$0xf]
  %v894 = vld [vmem:[%s9 + $0x18] sm:$0xf]
  %v895 = vld [vmem:[%s9 + $0x1c] sm:$0xf]
  %v896 = vld [vmem:[%s9 + $0x20] sm:$0xf]
  %v897 = vld [vmem:[%s9 + $0x24] sm:$0xf]
  %v898 = vld [vmem:[%s9 + $0x28] sm:$0xf]
  %v899 = vld [vmem:[%s9 + $0x2c] sm:$0xf]
  %v900 = vld [vmem:[%s9 + $0x30] sm:$0xf]
  %v901 = vld [vmem:[%s9 + $0x34] sm:$0xf]
  %v902 = vld [vmem:[%s9 + $0x38] sm:$0xf]
  %v903 = vld [vmem:[%s9 + $0x3c] sm:$0xf]
  %v904 = vld [vmem:[%s9 + $0x40] sm:$0xf]
  %v905 = vld [vmem:[%s9 + $0x44] sm:$0xf]
  %v906 = vld [vmem:[%s9 + $0x48] sm:$0xf]
  %v907 = vld [vmem:[%s9 + $0x4c] sm:$0xf]
  %v908 = vld [vmem:[%s9 + $0x50] sm:$0xf]
  %v909 = vld [vmem:[%s9 + $0x54] sm:$0xf]
  %v910 = vld [vmem:[%s9 + $0x58] sm:$0xf]
  %v911 = vld [vmem:[%s9 + $0x5c] sm:$0xf]
  %v912 = vld [vmem:[%s9 + $0x60] sm:$0xf]
  %v913 = vld [vmem:[%s9 + $0x64] sm:$0xf]
  %v914 = vld [vmem:[%s9 + $0x68] sm:$0xf]
  %v915 = vld [vmem:[%s9 + $0x6c] sm:$0xf]
  %v916 = vld [vmem:[%s9 + $0x70] sm:$0xf]
  %v917 = vld [vmem:[%s9 + $0x74] sm:$0xf]
  %v918 = vld [vmem:[%s9 + $0x78] sm:$0xf]
  %v919 = vld [vmem:[%s9 + $0x7c] sm:$0xf]
  %v920 = vld [vmem:[%s10] sm:$0xf]
  %v921 = vld [vmem:[%s10 + $0x4] sm:$0xf]
  %v922 = vld [vmem:[%s10 + $0x8] sm:$0xf]
  %v923 = vld [vmem:[%s10 + $0xc] sm:$0xf]
  %v924 = vld [vmem:[%s10 + $0x10] sm:$0xf]
  %v925 = vld [vmem:[%s10 + $0x14] sm:$0xf]
  %v926 = vld [vmem:[%s10 + $0x18] sm:$0xf]
  %v927 = vld [vmem:[%s10 + $0x1c] sm:$0xf]
  %v928 = vld [vmem:[%s10 + $0x20] sm:$0xf]
  %v929 = vld [vmem:[%s10 + $0x24] sm:$0xf]
  %v930 = vld [vmem:[%s10 + $0x28] sm:$0xf]
  %v931 = vld [vmem:[%s10 + $0x2c] sm:$0xf]
  %v932 = vld [vmem:[%s10 + $0x30] sm:$0xf]
  %v933 = vld [vmem:[%s10 + $0x34] sm:$0xf]
  %v934 = vld [vmem:[%s10 + $0x38] sm:$0xf]
  %v935 = vld [vmem:[%s10 + $0x3c] sm:$0xf]
  %v936 = vld [vmem:[%s10 + $0x40] sm:$0xf]
  %v937 = vld [vmem:[%s10 + $0x44] sm:$0xf]
  %v938 = vld [vmem:[%s10 + $0x48] sm:$0xf]
  %v939 = vld [vmem:[%s10 + $0x4c] sm:$0xf]
  %v940 = vld [vmem:[%s10 + $0x50] sm:$0xf]
  %v941 = vld [vmem:[%s10 + $0x54] sm:$0xf]
  %v942 = vld [vmem:[%s10 + $0x58] sm:$0xf]
  %v943 = vld [vmem:[%s10 + $0x5c] sm:$0xf]
  %v944 = vld [vmem:[%s10 + $0x60] sm:$0xf]
  %v945 = vld [vmem:[%s10 + $0x64] sm:$0xf]
  %v946 = vld [vmem:[%s10 + $0x68] sm:$0xf]
  %v947 = vld [vmem:[%s10 + $0x6c] sm:$0xf]
  %v948 = vld [vmem:[%s10 + $0x70] sm:$0xf]
  %v949 = vld [vmem:[%s10 + $0x74] sm:$0xf]
  %v950 = vld [vmem:[%s10 + $0x78] sm:$0xf]
  %v951 = vld [vmem:[%s10 + $0x7c] sm:$0xf]
  %v984 = vunpack.c.l.b16 %v920
  %v985 = vunpack.c.l.b16 %v921
  %v986 = vunpack.c.l.b16 %v922
  %v987 = vunpack.c.l.b16 %v923
  %v988 = vunpack.c.l.b16 %v924
  %v989 = vunpack.c.l.b16 %v925
  %v990 = vunpack.c.l.b16 %v926
  %v991 = vunpack.c.l.b16 %v927
  %v992 = vunpack.c.l.b16 %v928
  %v993 = vunpack.c.l.b16 %v929
  %v994 = vunpack.c.l.b16 %v930
  %v995 = vunpack.c.l.b16 %v931
  %v996 = vunpack.c.l.b16 %v932
  %v997 = vunpack.c.l.b16 %v933
  %v998 = vunpack.c.l.b16 %v934
  %v999 = vunpack.c.l.b16 %v935
  %v1000 = vunpack.c.l.b16 %v936
  %v1001 = vunpack.c.l.b16 %v937
  %v1002 = vunpack.c.l.b16 %v938
  %v1003 = vunpack.c.l.b16 %v939
  %v1004 = vunpack.c.l.b16 %v940
  %v1005 = vunpack.c.l.b16 %v941
  %v1006 = vunpack.c.l.b16 %v942
  %v1007 = vunpack.c.l.b16 %v943
  %v1008 = vunpack.c.l.b16 %v944
  %v1009 = vunpack.c.l.b16 %v945
  %v1010 = vunpack.c.l.b16 %v946
  %v1011 = vunpack.c.l.b16 %v947
  %v1012 = vunpack.c.l.b16 %v948
  %v1013 = vunpack.c.l.b16 %v949
  %v1014 = vunpack.c.l.b16 %v950
  %v1015 = vunpack.c.l.b16 %v951
  %v1016 = vpack.c.b16 %v985, %v984
  %v1017 = vpack.c.b16 %v987, %v986
  %v1018 = vpack.c.b16 %v989, %v988
  %v1019 = vpack.c.b16 %v991, %v990
  %v1020 = vpack.c.b16 %v993, %v992
  %v1021 = vpack.c.b16 %v995, %v994
  %v1022 = vpack.c.b16 %v997, %v996
  %v1023 = vpack.c.b16 %v999, %v998
  %v1024 = vpack.c.b16 %v1001, %v1000
  %v1025 = vpack.c.b16 %v1003, %v1002
  %v1026 = vpack.c.b16 %v1005, %v1004
  %v1027 = vpack.c.b16 %v1007, %v1006
  %v1028 = vpack.c.b16 %v1009, %v1008
  %v1029 = vpack.c.b16 %v1011, %v1010
  %v1030 = vpack.c.b16 %v1013, %v1012
  %v1031 = vpack.c.b16 %v1015, %v1014
  %1048 = vmatprep.subr.bf16.mxu0 0
  %1049 = vmatpush1.bf16.msra.mxu0 %v1023
  %1050 = vmatprep.subr.bf16.mxu0 0
  %1051 = vmatpush1.bf16.msra.mxu0 %v1022
  %1052 = vmatprep.subr.bf16.mxu0 0
  %1053 = vmatpush1.bf16.msra.mxu0 %v1021
  %1054 = vmatprep.subr.bf16.mxu0 0
  %1055 = vmatpush1.bf16.msra.mxu0 %v1020
  %1056 = vmatprep.subr.bf16.mxu0 0
  %1057 = vmatpush1.bf16.msra.mxu0 %v1019
  %1058 = vmatprep.subr.bf16.mxu0 0
  %1059 = vmatpush1.bf16.msra.mxu0 %v1018
  %1060 = vmatprep.subr.bf16.mxu0 0
  %1061 = vmatpush1.bf16.msra.mxu0 %v1017
  %1062 = vmatprep.subr.bf16.mxu0 0
  %1063 = vmatpush1.bf16.msra.mxu0 %v1016
  %1064 = vmatprep.subr.bf16.mxu0 0
  %1065 = vmatpush2.bf16.msra.mxu0 %v1031
  %1066 = vmatprep.subr.bf16.mxu0 0
  %1067 = vmatpush2.bf16.msra.mxu0 %v1030
  %1068 = vmatprep.subr.bf16.mxu0 0
  %1069 = vmatpush2.bf16.msra.mxu0 %v1029
  %1070 = vmatprep.subr.bf16.mxu0 0
  %1071 = vmatpush2.bf16.msra.mxu0 %v1028
  %1072 = vmatprep.subr.bf16.mxu0 0
  %1073 = vmatpush2.bf16.msra.mxu0 %v1027
  %1074 = vmatprep.subr.bf16.mxu0 0
  %1075 = vmatpush2.bf16.msra.mxu0 %v1026
  %1076 = vmatprep.subr.bf16.mxu0 0
  %1077 = vmatpush2.bf16.msra.mxu0 %v1025
  %1078 = vmatprep.subr.bf16.mxu0 0
  %1079 = vmatpush2.bf16.msra.mxu0 %v1024
  %1080 = vmatprep.mubr.bf16.mxu0 %v887
  %1081 = vmatmul.mubr.bf16.gmra.mxu0 %v886
  %v1082 = vpop.f32.mrf.mxu0
  %v1083 = vadd.f32 0.0, %v1082
  %v1084 = vpop.f32.mrf.mxu0
  %v1085 = vpop.f32.mrf.mxu0
  %v1086 = vpop.f32.mrf.mxu0
  %1087 = vdwg.mxu0
  %v1120 = vunpack.c.l.b16 %v888
  %v1121 = vunpack.c.l.b16 %v889
  %v1122 = vunpack.c.l.b16 %v890
  %v1123 = vunpack.c.l.b16 %v891
  %v1124 = vunpack.c.l.b16 %v892
  %v1125 = vunpack.c.l.b16 %v893
  %v1126 = vunpack.c.l.b16 %v894
  %v1127 = vunpack.c.l.b16 %v895
  %v1128 = vunpack.c.l.b16 %v896
  %v1129 = vunpack.c.l.b16 %v897
  %v1130 = vunpack.c.l.b16 %v898
  %v1131 = vunpack.c.l.b16 %v899
  %v1132 = vunpack.c.l.b16 %v900
  %v1133 = vunpack.c.l.b16 %v901
  %v1134 = vunpack.c.l.b16 %v902
  %v1135 = vunpack.c.l.b16 %v903
  %v1136 = vunpack.c.l.b16 %v904
  %v1137 = vunpack.c.l.b16 %v905
  %v1138 = vunpack.c.l.b16 %v906
  %v1139 = vunpack.c.l.b16 %v907
  %v1140 = vunpack.c.l.b16 %v908
  %v1141 = vunpack.c.l.b16 %v909
  %v1142 = vunpack.c.l.b16 %v910
  %v1143 = vunpack.c.l.b16 %v911
  %v1144 = vunpack.c.l.b16 %v912
  %v1145 = vunpack.c.l.b16 %v913
  %v1146 = vunpack.c.l.b16 %v914
  %v1147 = vunpack.c.l.b16 %v915
  %v1148 = vunpack.c.l.b16 %v916
  %v1149 = vunpack.c.l.b16 %v917
  %v1150 = vunpack.c.l.b16 %v918
  %v1151 = vunpack.c.l.b16 %v919
  %v1152 = vpack.c.b16 %v1121, %v1120
  %v1153 = vpack.c.b16 %v1123, %v1122
  %v1154 = vpack.c.b16 %v1125, %v1124
  %v1155 = vpack.c.b16 %v1127, %v1126
  %v1156 = vpack.c.b16 %v1129, %v1128
  %v1157 = vpack.c.b16 %v1131, %v1130
  %v1158 = vpack.c.b16 %v1133, %v1132
  %v1159 = vpack.c.b16 %v1135, %v1134
  %v1160 = vpack.c.b16 %v1137, %v1136
  %v1161 = vpack.c.b16 %v1139, %v1138
  %v1162 = vpack.c.b16 %v1141, %v1140
  %v1163 = vpack.c.b16 %v1143, %v1142
  %v1164 = vpack.c.b16 %v1145, %v1144
  %v1165 = vpack.c.b16 %v1147, %v1146
  %v1166 = vpack.c.b16 %v1149, %v1148
  %v1167 = vpack.c.b16 %v1151, %v1150
  %1184 = vmatprep.subr.bf16.mxu0 0
  %1185 = vmatpush1.bf16.msra.mxu0 %v1159
  %1186 = vmatprep.subr.bf16.mxu0 0
  %1187 = vmatpush1.bf16.msra.mxu0 %v1158
  %1188 = vmatprep.subr.bf16.mxu0 0
  %1189 = vmatpush1.bf16.msra.mxu0 %v1157
  %1190 = vmatprep.subr.bf16.mxu0 0
  %1191 = vmatpush1.bf16.msra.mxu0 %v1156
  %1192 = vmatprep.subr.bf16.mxu0 0
  %1193 = vmatpush1.bf16.msra.mxu0 %v1155
  %1194 = vmatprep.subr.bf16.mxu0 0
  %1195 = vmatpush1.bf16.msra.mxu0 %v1154
  %1196 = vmatprep.subr.bf16.mxu0 0
  %1197 = vmatpush1.bf16.msra.mxu0 %v1153
  %1198 = vmatprep.subr.bf16.mxu0 0
  %1199 = vmatpush1.bf16.msra.mxu0 %v1152
  %1200 = vmatprep.subr.bf16.mxu0 0
  %1201 = vmatpush2.bf16.msra.mxu0 %v1167
  %1202 = vmatprep.subr.bf16.mxu0 0
  %1203 = vmatpush2.bf16.msra.mxu0 %v1166
  %1204 = vmatprep.subr.bf16.mxu0 0
  %1205 = vmatpush2.bf16.msra.mxu0 %v1165
  %1206 = vmatprep.subr.bf16.mxu0 0
  %1207 = vmatpush2.bf16.msra.mxu0 %v1164
  %1208 = vmatprep.subr.bf16.mxu0 0
  %1209 = vmatpush2.bf16.msra.mxu0 %v1163
  %1210 = vmatprep.subr.bf16.mxu0 0
  %1211 = vmatpush2.bf16.msra.mxu0 %v1162
  %1212 = vmatprep.subr.bf16.mxu0 0
  %1213 = vmatpush2.bf16.msra.mxu0 %v1161
  %1214 = vmatprep.subr.bf16.mxu0 0
  %1215 = vmatpush2.bf16.msra.mxu0 %v1160
  %1216 = vmatprep.mubr.bf16.mxu0 %v869
  %1217 = vmatmul.mubr.bf16.gmra.mxu0 %v868
  %v1218 = vpop.f32.mrf.mxu0
  %v1219 = vadd.f32 %v1083, %v1218
  %v1220 = vpop.f32.mrf.mxu0
  %v1221 = vpop.f32.mrf.mxu0
  %v1222 = vpop.f32.mrf.mxu0
  %1223 = vdwg.mxu0
  %v1224 = vld [vmem:[%s11] sm:$0x1]
  %v1226 = vlaneseq
  %v1227 = vshrl.u32 %v1226, 7
  %v1228 = vsub.s32 0, %v1227
  %v1229 = vrot.slane %v1224, %v1228
  %v1231 = vadd.f32 %v1219, %v1229
  %vm1232 = vcmask 15360
  %1233 = vst.msk [vmem:[%s12] sm:$0xff] %vm1232, %v1231
  // Predicated region
  $region50: #{critic_forward.1} parent=0 // pred_check
    _
  $region51: #{critic_forward.1} parent=0 // pred_check_branch
    %1235 = sbr.rel (0) target = $region53
  $region52: #{critic_forward.1} parent=0 // pred_region
    _
  $region53: #{critic_forward.1} parent=0 // pred_fallthru
    _
  // Predicated region
  $region54: #{critic_forward.1} parent=0 // pred_check
    _
  $region55: #{critic_forward.1} parent=0 // pred_check_branch
    %1237 = sbr.rel (0) target = $region57
  $region56: #{critic_forward.1} parent=0 // pred_region
    _
  $region57: #{critic_forward.1} parent=0 // pred_fallthru
    _

</llo_original>
